<compile_context>
chip_gen: v6e
topology: v6e:2x2x1
jax: 0.10.0
libtpu: 0.0.40
codegen_flags: <defaults>
</compile_context>

<pallas_src>
import math

import jax
import jax.numpy as jnp
from jax.experimental import pallas as pl
from jax.experimental.pallas import tpu as pltpu

# Globals implied by the original script (small & consistent with usage).
N_CHANNELS = 4
CENTRAL_RANGE = 16
ACG_LEN = 8
OUT_DIM = N_CHANNELS * CENTRAL_RANGE + ACG_LEN          # 72
D_LATENT = 16
H1 = 125
H2 = 250

# Padded (vreg / MXU friendly) dims.
H1P = 128
H2P = 256
OUT_PAD = 128           # per-head padded width
OUT_FUSED = 2 * OUT_PAD  # fused mean|log-scale output width (256)

# clip(exp(x), 1e-5, 1e5) == exp(clip(x, log 1e-5, log 1e5)) for finite x.
LOG_MIN = math.log(1e-5)
LOG_MAX = math.log(1e5)

# Batch tile: multiple of 8, sized to amortize per-grid-step overhead while staying
# well inside v5e's 16 MiB default scoped VMEM (~5 MiB double-buffered at f32 out).
DEFAULT_BLOCK_B = 2048


def _round_up(x, m):
    return ((x + m - 1) // m) * m


def _decoder_kernel(z_ref, w1_ref, b1_ref, w2_ref, b2_ref, w3_ref, b3_ref, out_ref):
    cdt = w1_ref.dtype  # matmul operand dtype (f32 or bf16); accumulate in f32
    z = z_ref[...].astype(cdt)  # Z arrives f32; cast in-kernel (no extra XLA cast)
    # fc1 + relu
    h = jnp.dot(z, w1_ref[...], preferred_element_type=jnp.float32)
    h = jnp.maximum(h + b1_ref[...], 0.0).astype(cdt)
    # fc2 + relu
    h = jnp.dot(h, w2_ref[...], preferred_element_type=jnp.float32)
    h = jnp.maximum(h + b2_ref[...], 0.0).astype(cdt)
    # dropout(p=0.1) is identity at inference (eval mode).
    # TODO(synk): training-mode dropout (stateful PRNG mask) not implemented.
    # fc3: single fused 256-wide head -> [mean | log-scale], one MXU pass.
    h3 = jnp.dot(h, w3_ref[...], preferred_element_type=jnp.float32) + b3_ref[...]
    mean = h3[:, :OUT_PAD]                                        # vreg-aligned halves
    scale = jnp.exp(jnp.clip(h3[:, OUT_PAD:], LOG_MIN, LOG_MAX))
    out_ref[:, :OUT_PAD] = mean.astype(out_ref.dtype)
    out_ref[:, OUT_PAD:] = scale.astype(out_ref.dtype)


def prepare_params(raw_params, compute_dtype=jnp.float32):
    """Pad raw (in_features, out_features) params to vreg-friendly shapes and fuse
    fc3's mean/log-scale heads into one lane-aligned 256-wide weight.  Run once,
    outside the hot path."""
    w1, b1, w2, b2, w3, b3 = raw_params

    def pad2(a, rows, cols):
        return jnp.pad(a, ((0, rows - a.shape[0]), (0, cols - a.shape[1])))

    w1p = pad2(w1, D_LATENT, H1P).astype(compute_dtype)
    b1p = pad2(b1, 1, H1P).astype(jnp.float32)
    w2p = pad2(w2, H1P, H2P).astype(compute_dtype)
    b2p = pad2(b2, 1, H2P).astype(jnp.float32)
    # fc3 fused: lanes [0,128) = mean head (72 used), lanes [128,256) = log-scale head.
    w3m = pad2(w3[:, :OUT_DIM], H2, OUT_PAD)
    w3s = pad2(w3[:, OUT_DIM:], H2, OUT_PAD)
    w3f = pad2(jnp.concatenate([w3m, w3s], axis=1), H2P, OUT_FUSED).astype(compute_dtype)
    b3m = pad2(b3[:, :OUT_DIM], 1, OUT_PAD)
    b3s = pad2(b3[:, OUT_DIM:], 1, OUT_PAD)
    b3f = jnp.concatenate([b3m, b3s], axis=1).astype(jnp.float32)
    return (w1p, b1p, w2p, b2p, w3f, b3f)


def forward_full_decoder(Z, prepared_params, *, block_b=DEFAULT_BLOCK_B,
                         out_dtype=jnp.float32, pad_outputs=False):
    """Normal p(x|z) parameters.

    Default: returns (mean, scale), each (B, 1, OUT_DIM).
    pad_outputs=True: returns the raw padded (b_pad, 256) buffer (mean in
    [:, :OUT_DIM], scale in [:, OUT_PAD:OUT_PAD+OUT_DIM]) so no post-kernel
    compaction copies are launched (the kernel is writeback-bound).
    out_dtype=jnp.bfloat16 halves output HBM traffic (accumulation stays f32).
    """
    w1p, b1p, w2p, b2p, w3f, b3f = prepared_params
    B = Z.shape[0]
    Z = Z.astype(jnp.float32)  # kernel casts to compute dtype internally

    # Batch tiling: multiple of 8 (f32 sublane).  For small/medium B, split into
    # >=2 tiles so v7x's two TensorCores both get work ("parallel" grid axis).
    if B > block_b:
        tb = block_b
    else:
        tb = max(8, _round_up(pl.cdiv(B, 2), 8))
    b_pad = _round_up(B, tb)
    if b_pad != B:
        Z = jnp.pad(Z, ((0, b_pad - B), (0, 0)))  # zero rows, sliced off below

    grid = (b_pad // tb,)
    resident = lambda a: pl.BlockSpec(a.shape, lambda i: (0, 0))  # stays in VMEM

    out_p = pl.pallas_call(
        _decoder_kernel,
        out_shape=jax.ShapeDtypeStruct((b_pad, OUT_FUSED), out_dtype),
        grid=grid,
        in_specs=[
            pl.BlockSpec((tb, D_LATENT), lambda i: (i, 0)),
            resident(w1p), resident(b1p),
            resident(w2p), resident(b2p),
            resident(w3f), resident(b3f),
        ],
        out_specs=pl.BlockSpec((tb, OUT_FUSED), lambda i: (i, 0)),
        compiler_params=pltpu.CompilerParams(
            dimension_semantics=("parallel",)),
    )(Z, w1p, b1p, w2p, b2p, w3f, b3f)

    if pad_outputs:
        return out_p

    # Glue (optional): drop padding, reshape to the distribution's event layout.
    mean = out_p[:B, :OUT_DIM].reshape(-1, 1, OUT_DIM)
    scale = out_p[:B, OUT_PAD:OUT_PAD + OUT_DIM].reshape(-1, 1, OUT_DIM)
    return mean, scale


def init_params(key):
    """Deterministic parameter init matching the module's layer shapes.
    Weights are stored (in_features, out_features), i.e. PyTorch weight.T."""
    k1, k2, k3, k4, k5, k6 = jax.random.split(key, 6)

    def unif(k, shape, fan_in):
        bound = 1.0 / jnp.sqrt(fan_in)
        return jax.random.uniform(k, shape, jnp.float32, -bound, bound)

    w1 = unif(k1, (D_LATENT, H1), D_LATENT)
    b1 = unif(k2, (1, H1), D_LATENT)
    w2 = unif(k3, (H1, H2), H1)
    b2 = unif(k4, (1, H2), H1)
    w3 = unif(k5, (H2, 2 * OUT_DIM), H2)
    b3 = unif(k6, (1, 2 * OUT_DIM), H2)
    return (w1, b1, w2, b2, w3, b3)


def _reference(Z, raw_params, compute_dtype):
    """Pure-JAX reference mirroring the kernel's math (same operand dtype)."""
    w1, b1, w2, b2, w3, b3 = raw_params
    c = lambda a: a.astype(compute_dtype)
    h = jnp.maximum(jnp.dot(c(Z), c(w1), preferred_element_type=jnp.float32) + b1, 0.0)
    h = jnp.maximum(jnp.dot(c(h), c(w2), preferred_element_type=jnp.float32) + b2, 0.0)
    h = jnp.dot(c(h), c(w3), preferred_element_type=jnp.float32) + b3
    mean = h[:, :OUT_DIM].reshape(-1, 1, OUT_DIM)
    scale = jnp.exp(jnp.clip(h[:, OUT_DIM:], LOG_MIN, LOG_MAX)).reshape(-1, 1, OUT_DIM)
    return mean, scale


if __name__ == "__main__":
    key = jax.random.PRNGKey(0)
    kp, kz = jax.random.split(key)
    raw = init_params(kp)
    params_f32 = prepare_params(raw, jnp.float32)

    # --- f32 path, B=20 -> tb=16, grid=(2,) (exercises multi-TC sharding + padding) ---
    B = 20
    Z = jax.random.normal(kz, (B, D_LATENT), jnp.float32)
    mean, scale = forward_full_decoder(Z, params_f32)
    jax.block_until_ready((mean, scale))
    ref_mean, ref_scale = _reference(Z, raw, jnp.float32)
    assert mean.shape == (B, 1, OUT_DIM) and scale.shape == (B, 1, OUT_DIM)
    assert jnp.allclose(mean, ref_mean, atol=1e-4, rtol=1e-4)
    assert jnp.allclose(scale, ref_scale, atol=1e-4, rtol=1e-4)

    # --- f32 path, tiny ragged batch (single-tile path, sublane padding) ---
    B2 = 5
    mean2, scale2 = forward_full_decoder(Z[:B2], params_f32)
    jax.block_until_ready((mean2, scale2))
    assert jnp.allclose(mean2, ref_mean[:B2], atol=1e-4, rtol=1e-4)
    assert jnp.allclose(scale2, ref_scale[:B2], atol=1e-4, rtol=1e-4)

    # --- padded-layout output (no post-kernel compaction copies) ---
    out_pad = forward_full_decoder(Z, params_f32, pad_outputs=True)
    jax.block_until_ready(out_pad)
    assert jnp.allclose(out_pad[:B, :OUT_DIM], ref_mean.reshape(B, OUT_DIM),
                        atol=1e-4, rtol=1e-4)
    assert jnp.allclose(out_pad[:B, OUT_PAD:OUT_PAD + OUT_DIM],
                        ref_scale.reshape(B, OUT_DIM), atol=1e-4, rtol=1e-4)

    # --- bf16 operands + bf16 outputs (halves writeback traffic), f32 accumulate ---
    params_bf16 = prepare_params(raw, jnp.bfloat16)
    mean_b, scale_b = forward_full_decoder(Z[:8], params_bf16, out_dtype=jnp.bfloat16)
    jax.block_until_ready((mean_b, scale_b))
    ref_mean_b, ref_scale_b = _reference(Z[:8], raw, jnp.bfloat16)
    assert jnp.allclose(mean_b.astype(jnp.float32), ref_mean_b, atol=3e-2, rtol=3e-2)
    assert jnp.allclose(scale_b.astype(jnp.float32), ref_scale_b, atol=3e-2, rtol=3e-2)

    print("KERNEL_OK")
</pallas_src>

<mosaic_0001>
module attributes {stable_mosaic.version = 11 : i64} {
  func.func @_decoder_kernel(%arg0: i32, %arg1: memref<16x16xf32, #tpu.memory_space<vmem>>, %arg2: memref<16x128xf32, #tpu.memory_space<vmem>>, %arg3: memref<1x128xf32, #tpu.memory_space<vmem>>, %arg4: memref<128x256xf32, #tpu.memory_space<vmem>>, %arg5: memref<1x256xf32, #tpu.memory_space<vmem>>, %arg6: memref<256x256xf32, #tpu.memory_space<vmem>>, %arg7: memref<1x256xf32, #tpu.memory_space<vmem>>, %arg8: memref<16x256xf32, #tpu.memory_space<vmem>>) attributes {dimension_semantics = [#tpu.dimension_semantics<parallel>], iteration_bounds = array<i64: 2>, scalar_prefetch = 0 : i64, scratch_operands = 0 : i64, tpu.core_type = #tpu.core_type<tc>, window_params = [{transform_indices = @transform_0, window_bounds = array<i64: 16, 16>}, {pipeline_mode = #tpu.pipeline_mode<synchronous>, transform_indices = @transform_1, window_bounds = array<i64: 16, 128>}, {pipeline_mode = #tpu.pipeline_mode<synchronous>, transform_indices = @transform_2, window_bounds = array<i64: 1, 128>}, {pipeline_mode = #tpu.pipeline_mode<synchronous>, transform_indices = @transform_3, window_bounds = array<i64: 128, 256>}, {pipeline_mode = #tpu.pipeline_mode<synchronous>, transform_indices = @transform_4, window_bounds = array<i64: 1, 256>}, {pipeline_mode = #tpu.pipeline_mode<synchronous>, transform_indices = @transform_5, window_bounds = array<i64: 256, 256>}, {pipeline_mode = #tpu.pipeline_mode<synchronous>, transform_indices = @transform_6, window_bounds = array<i64: 1, 256>}, {transform_indices = @transform_7, window_bounds = array<i64: 16, 256>}]} {
    %c0 = arith.constant 0 : index
    %c0_0 = arith.constant 0 : index
    %0 = vector.load %arg1[%c0, %c0_0] : memref<16x16xf32, #tpu.memory_space<vmem>>, vector<16x16xf32>
    %c0_1 = arith.constant 0 : index
    %c0_2 = arith.constant 0 : index
    %1 = vector.load %arg2[%c0_1, %c0_2] : memref<16x128xf32, #tpu.memory_space<vmem>>, vector<16x128xf32>
    %cst = arith.constant dense<0.000000e+00> : vector<16x128xf32>
    %2 = tpu.matmul %0, %1, %cst {dimension_numbers = #tpu.dot_dimension_numbers<[1], [0], [0], [1], [0, 0, 1, 1], [], []>} : vector<16x16xf32>, vector<16x128xf32>, vector<16x128xf32> -> vector<16x128xf32>
    %c0_3 = arith.constant 0 : index
    %c0_4 = arith.constant 0 : index
    %3 = vector.load %arg3[%c0_3, %c0_4] : memref<1x128xf32, #tpu.memory_space<vmem>>, vector<1x128xf32>
    %4 = vector.broadcast %3 : vector<1x128xf32> to vector<16x128xf32>
    %5 = arith.addf %2, %4 : vector<16x128xf32>
    %cst_5 = arith.constant 0.000000e+00 : f32
    %6 = vector.broadcast %cst_5 : f32 to vector<16x128xf32>
    %7 = arith.maximumf %5, %6 : vector<16x128xf32>
    %c0_6 = arith.constant 0 : index
    %c0_7 = arith.constant 0 : index
    %8 = vector.load %arg4[%c0_6, %c0_7] : memref<128x256xf32, #tpu.memory_space<vmem>>, vector<128x256xf32>
    %cst_8 = arith.constant dense<0.000000e+00> : vector<16x256xf32>
    %9 = tpu.matmul %7, %8, %cst_8 {dimension_numbers = #tpu.dot_dimension_numbers<[1], [0], [0], [1], [0, 0, 1, 1], [], []>} : vector<16x128xf32>, vector<128x256xf32>, vector<16x256xf32> -> vector<16x256xf32>
    %c0_9 = arith.constant 0 : index
    %c0_10 = arith.constant 0 : index
    %10 = vector.load %arg5[%c0_9, %c0_10] : memref<1x256xf32, #tpu.memory_space<vmem>>, vector<1x256xf32>
    %11 = vector.broadcast %10 : vector<1x256xf32> to vector<16x256xf32>
    %12 = arith.addf %9, %11 : vector<16x256xf32>
    %cst_11 = arith.constant 0.000000e+00 : f32
    %13 = vector.broadcast %cst_11 : f32 to vector<16x256xf32>
    %14 = arith.maximumf %12, %13 : vector<16x256xf32>
    %c0_12 = arith.constant 0 : index
    %c0_13 = arith.constant 0 : index
    %15 = vector.load %arg6[%c0_12, %c0_13] : memref<256x256xf32, #tpu.memory_space<vmem>>, vector<256x256xf32>
    %cst_14 = arith.constant dense<0.000000e+00> : vector<16x256xf32>
    %16 = tpu.matmul %14, %15, %cst_14 {dimension_numbers = #tpu.dot_dimension_numbers<[1], [0], [0], [1], [0, 0, 1, 1], [], []>} : vector<16x256xf32>, vector<256x256xf32>, vector<16x256xf32> -> vector<16x256xf32>
    %c0_15 = arith.constant 0 : index
    %c0_16 = arith.constant 0 : index
    %17 = vector.load %arg7[%c0_15, %c0_16] : memref<1x256xf32, #tpu.memory_space<vmem>>, vector<1x256xf32>
    %18 = vector.broadcast %17 : vector<1x256xf32> to vector<16x256xf32>
    %19 = arith.addf %16, %18 : vector<16x256xf32>
    %20 = vector.extract_strided_slice %19 {offsets = [0, 0], sizes = [16, 128], strides = [1, 1]} : vector<16x256xf32> to vector<16x128xf32>
    %21 = vector.extract_strided_slice %19 {offsets = [0, 128], sizes = [16, 128], strides = [1, 1]} : vector<16x256xf32> to vector<16x128xf32>
    %cst_17 = arith.constant -11.5129251 : f32
    %cst_18 = arith.constant 11.5129251 : f32
    %22 = vector.broadcast %cst_17 : f32 to vector<16x128xf32>
    %23 = arith.maximumf %22, %21 : vector<16x128xf32>
    %24 = vector.broadcast %cst_18 : f32 to vector<16x128xf32>
    %25 = arith.minimumf %24, %23 : vector<16x128xf32>
    %26 = math.exp %25 : vector<16x128xf32>
    %c0_19 = arith.constant 0 : index
    %c0_20 = arith.constant 0 : index
    %27 = vector.load %arg8[%c0_19, %c0_20] : memref<16x256xf32, #tpu.memory_space<vmem>>, vector<16x128xf32>
    tpu.vector_store %arg8[%c0_19, %c0_20], %20 {strides = array<i32>} : memref<16x256xf32, #tpu.memory_space<vmem>>, vector<16x128xf32>,
    %c0_21 = arith.constant 0 : index
    %c128 = arith.constant 128 : index
    %28 = vector.load %arg8[%c0_21, %c128] : memref<16x256xf32, #tpu.memory_space<vmem>>, vector<16x128xf32>
    tpu.vector_store %arg8[%c0_21, %c128], %26 {strides = array<i32>} : memref<16x256xf32, #tpu.memory_space<vmem>>, vector<16x128xf32>,
    return
  }
  func.func @transform_0(%arg0: i32) -> (i32, i32) {
    %c0_i32 = arith.constant 0 : i32
    %c0_i32_0 = arith.constant 0 : i32
    return %arg0, %c0_i32 : i32, i32
  }
  func.func @transform_1(%arg0: i32) -> (i32, i32) {
    %c0_i32 = arith.constant 0 : i32
    %c0_i32_0 = arith.constant 0 : i32
    %c0_i32_1 = arith.constant 0 : i32
    return %c0_i32, %c0_i32_0 : i32, i32
  }
  func.func @transform_2(%arg0: i32) -> (i32, i32) {
    %c0_i32 = arith.constant 0 : i32
    %c0_i32_0 = arith.constant 0 : i32
    %c0_i32_1 = arith.constant 0 : i32
    return %c0_i32, %c0_i32_0 : i32, i32
  }
  func.func @transform_3(%arg0: i32) -> (i32, i32) {
    %c0_i32 = arith.constant 0 : i32
    %c0_i32_0 = arith.constant 0 : i32
    %c0_i32_1 = arith.constant 0 : i32
    return %c0_i32, %c0_i32_0 : i32, i32
  }
  func.func @transform_4(%arg0: i32) -> (i32, i32) {
    %c0_i32 = arith.constant 0 : i32
    %c0_i32_0 = arith.constant 0 : i32
    %c0_i32_1 = arith.constant 0 : i32
    return %c0_i32, %c0_i32_0 : i32, i32
  }
  func.func @transform_5(%arg0: i32) -> (i32, i32) {
    %c0_i32 = arith.constant 0 : i32
    %c0_i32_0 = arith.constant 0 : i32
    %c0_i32_1 = arith.constant 0 : i32
    return %c0_i32, %c0_i32_0 : i32, i32
  }
  func.func @transform_6(%arg0: i32) -> (i32, i32) {
    %c0_i32 = arith.constant 0 : i32
    %c0_i32_0 = arith.constant 0 : i32
    %c0_i32_1 = arith.constant 0 : i32
    return %c0_i32, %c0_i32_0 : i32, i32
  }
  func.func @transform_7(%arg0: i32) -> (i32, i32) {
    %c0_i32 = arith.constant 0 : i32
    %c0_i32_0 = arith.constant 0 : i32
    return %arg0, %c0_i32 : i32, i32
  }
}

</mosaic_0001>

<llo_original>
// kernel: tpu_custom_call.1
$region0: #{tpu_custom_call.1}
  #allocation0 [shape = 'u32[]', space=smem, size = 0x4, offset = 0x4, fixed_abs, tag = 'smem constant byte address 0x4 - core index']
  #allocation1 [shape = 'u32[144,128]{1,0:T(1,128)}', space=vmem, size = 0x12000, scoped, tag = 'internal scratch']
  %s0 = inlined_call_operand.vmem [shape: f32[32,16], index: 0, kind: input, shape index: {}]
  %s1 = inlined_call_operand.vmem [shape: f32[16,128], index: 1, kind: input, shape index: {}]
  %s2 = inlined_call_operand.vmem [shape: f32[1,128], index: 2, kind: input, shape index: {}]
  %s3 = inlined_call_operand.hbm [shape: f32[128,256], index: 3, kind: input, shape index: {}]
  %s4 = inlined_call_operand.vmem [shape: f32[1,256], index: 4, kind: input, shape index: {}]
  %s5 = inlined_call_operand.hbm [shape: f32[256,256], index: 5, kind: input, shape index: {}]
  %s6 = inlined_call_operand.vmem [shape: f32[1,256], index: 6, kind: input, shape index: {}]
  %s7 = inlined_call_operand.hbm [shape: f32[32,256], index: 7, kind: output, shape index: {}]
  %s8 = sld [smem:[#allocation0]]
  $region69: #{tpu_custom_call.1} parent=0
    _
  %s10 = ssub.s32 1, %s8
  %s11 = scalar_select 0, %s10, %s8
  $region1: #{tpu_custom_call.1} parent=0
    #allocation2 [shape = 'u8[131072]{0}', space=vmem, size = 0x20000, scoped, tag = 'input window, operand 3, single buffered']
    #allocation3 [shape = 's32[2]{0}', space=sflag, size = 0x8, scoped, tag = 'scoped memory for tpu_custom_call.1']
    #allocation4 [shape = 's32[2]{0}', space=sflag, size = 0x8, scoped, tag = 'scoped memory for tpu_custom_call.1']
    #allocation5 [shape = 'u8[262144]{0}', space=vmem, size = 0x40000, scoped, tag = 'input window, operand 5, single buffered']
    #allocation6 [shape = 's32[1]{0}', space=sflag, size = 0x4, scoped, tag = 'scoped memory for tpu_custom_call.1']
    #allocation7 [shape = 'u8[32768]{0}', space=vmem, size = 0x8000, scoped, tag = 'output window, operand 0']
    %12 = vsyncpa [#allocation3], 0
    %13 = vsyncpa [#allocation6], 0
    %14 = vsyncpa [#allocation4], 0
    %s15 = scalar_lea.sflag [#allocation4], 1
    %16 = vsyncpa %s15, 0
    loop: start=0, step=1, limit=4
    $region2: #{tpu_custom_call.1} parent=1 // loop_pre_header
      _
    $region3: #{tpu_custom_call.1} parent=1 // loop_header
      %s18 = sphi 0, %s22
      %p19 = scmp.ge.s32.totalorder %s18, 4
      %s28 = sphi 0, %s30
      %s31 = sphi 0, %s28
      %s32 = sphi 0, %s31
      %s48 = sphi 0, %s32
      %s52 = sphi 0, %s52
      %s54 = sphi 0, %s52
      %s55 = sphi 0, %s54
      %s69 = sphi 0, %s55
      %s73 = sphi 0, %s73
      %s75 = sphi 0, %s73
      %s76 = sphi 0, %s75
      %s90 = sphi 0, %s76
      %s94 = sphi 0, %s94
      %s96 = sphi 0, %s94
      %s97 = sphi 0, %s96
      %s111 = sphi 0, %s97
      %s115 = sphi 0, %s115
      %s117 = sphi 0, %s115
      %s118 = sphi 0, %s117
      %s132 = sphi 0, %s118
      %s136 = sphi 0, %s136
      %s138 = sphi 0, %s136
      %s139 = sphi 0, %s138
      %s153 = sphi 0, %s139
      %s157 = sphi 0, %s157
      %s159 = sphi 0, %s157
      %s160 = sphi 0, %s159
      %s174 = sphi 0, %s160
      %s180 = sphi 0, %s182
      %s183 = sphi 0, %s180
      %s184 = sphi 0, %s183
      %s200 = sphi 0, %s184
    $region4: #{tpu_custom_call.1} parent=1 // loop_header_branch
      %21 = sbr.rel (%p19) target = $region8
    $region5: #{tpu_custom_call.1} parent=1 // loop_body
      %s23 = ssub.s32 %s18, 1
      %s24 = ssub.s32 %s18, 2
      %s25 = sadd.s32 %s18, 1
      %s26 = ssub.s32 %s18, %s25
      %p27 = scmp.eq.s32.totalorder %s26, 0
      %s29 = sadd.s32 %s28, 1
      %s30 = scalar_select %p27, %s28, %s29
      %p33 = pneg %p27
      %p34 = scmp.eq.s32.totalorder %s18, 1
      %p35 = por %p33, %p34
      %p36 = scmp.ne.s32.totalorder %s28, %s31
      %p37 = scmp.eq.s32.totalorder %s18, 0
      %p38 = por %p36, %p37
      %p39 = scmp.ne.s32.totalorder %s28, %s31
      %p40 = scmp.eq.s32.totalorder %s23, 1
      %p41 = por %p39, %p40
      %p42 = scmp.ne.s32.totalorder %s31, %s32
      %p43 = scmp.eq.s32.totalorder %s23, 0
      %p44 = por %p42, %p43
      %p45 = scmp.ne.s32.totalorder %s31, %s32
      %p46 = scmp.eq.s32.totalorder %s24, 1
      %p47 = por %p45, %p46
      %p49 = scmp.ne.s32.totalorder %s32, %s48
      %p50 = scmp.eq.s32.totalorder %s24, 0
      %p51 = por %p49, %p50
      %s53 = sadd.s32 %s52, 1
      %p56 = scmp.eq.s32.totalorder %s18, 1
      %p57 = scmp.ne.s32.totalorder %s52, %s54
      %p58 = scmp.eq.s32.totalorder %s18, 0
      %p59 = por %p57, %p58
      %p60 = scmp.ne.s32.totalorder %s52, %s54
      %p61 = scmp.eq.s32.totalorder %s23, 1
      %p62 = por %p60, %p61
      %p63 = scmp.ne.s32.totalorder %s54, %s55
      %p64 = scmp.eq.s32.totalorder %s23, 0
      %p65 = por %p63, %p64
      %p66 = scmp.ne.s32.totalorder %s54, %s55
      %p67 = scmp.eq.s32.totalorder %s24, 1
      %p68 = por %p66, %p67
      %p70 = scmp.ne.s32.totalorder %s55, %s69
      %p71 = scmp.eq.s32.totalorder %s24, 0
      %p72 = por %p70, %p71
      %s74 = sadd.s32 %s73, 1
      %p77 = scmp.eq.s32.totalorder %s18, 1
      %p78 = scmp.ne.s32.totalorder %s73, %s75
      %p79 = scmp.eq.s32.totalorder %s18, 0
      %p80 = por %p78, %p79
      %p81 = scmp.ne.s32.totalorder %s73, %s75
      %p82 = scmp.eq.s32.totalorder %s23, 1
      %p83 = por %p81, %p82
      %p84 = scmp.ne.s32.totalorder %s75, %s76
      %p85 = scmp.eq.s32.totalorder %s23, 0
      %p86 = por %p84, %p85
      %p87 = scmp.ne.s32.totalorder %s75, %s76
      %p88 = scmp.eq.s32.totalorder %s24, 1
      %p89 = por %p87, %p88
      %p91 = scmp.ne.s32.totalorder %s76, %s90
      %p92 = scmp.eq.s32.totalorder %s24, 0
      %p93 = por %p91, %p92
      %s95 = sadd.s32 %s94, 1
      %p98 = scmp.eq.s32.totalorder %s18, 1
      %p99 = scmp.ne.s32.totalorder %s94, %s96
      %p100 = scmp.eq.s32.totalorder %s18, 0
      %p101 = por %p99, %p100
      %p102 = scmp.ne.s32.totalorder %s94, %s96
      %p103 = scmp.eq.s32.totalorder %s23, 1
      %p104 = por %p102, %p103
      %p105 = scmp.ne.s32.totalorder %s96, %s97
      %p106 = scmp.eq.s32.totalorder %s23, 0
      %p107 = por %p105, %p106
      %p108 = scmp.ne.s32.totalorder %s96, %s97
      %p109 = scmp.eq.s32.totalorder %s24, 1
      %p110 = por %p108, %p109
      %p112 = scmp.ne.s32.totalorder %s97, %s111
      %p113 = scmp.eq.s32.totalorder %s24, 0
      %p114 = por %p112, %p113
      %s116 = sadd.s32 %s115, 1
      %p119 = scmp.eq.s32.totalorder %s18, 1
      %p120 = scmp.ne.s32.totalorder %s115, %s117
      %p121 = scmp.eq.s32.totalorder %s18, 0
      %p122 = por %p120, %p121
      %p123 = scmp.ne.s32.totalorder %s115, %s117
      %p124 = scmp.eq.s32.totalorder %s23, 1
      %p125 = por %p123, %p124
      %p126 = scmp.ne.s32.totalorder %s117, %s118
      %p127 = scmp.eq.s32.totalorder %s23, 0
      %p128 = por %p126, %p127
      %p129 = scmp.ne.s32.totalorder %s117, %s118
      %p130 = scmp.eq.s32.totalorder %s24, 1
      %p131 = por %p129, %p130
      %p133 = scmp.ne.s32.totalorder %s118, %s132
      %p134 = scmp.eq.s32.totalorder %s24, 0
      %p135 = por %p133, %p134
      %s137 = sadd.s32 %s136, 1
      %p140 = scmp.eq.s32.totalorder %s18, 1
      %p141 = scmp.ne.s32.totalorder %s136, %s138
      %p142 = scmp.eq.s32.totalorder %s18, 0
      %p143 = por %p141, %p142
      %p144 = scmp.ne.s32.totalorder %s136, %s138
      %p145 = scmp.eq.s32.totalorder %s23, 1
      %p146 = por %p144, %p145
      %p147 = scmp.ne.s32.totalorder %s138, %s139
      %p148 = scmp.eq.s32.totalorder %s23, 0
      %p149 = por %p147, %p148
      %p150 = scmp.ne.s32.totalorder %s138, %s139
      %p151 = scmp.eq.s32.totalorder %s24, 1
      %p152 = por %p150, %p151
      %p154 = scmp.ne.s32.totalorder %s139, %s153
      %p155 = scmp.eq.s32.totalorder %s24, 0
      %p156 = por %p154, %p155
      %s158 = sadd.s32 %s157, 1
      %p161 = scmp.eq.s32.totalorder %s18, 1
      %p162 = scmp.ne.s32.totalorder %s157, %s159
      %p163 = scmp.eq.s32.totalorder %s18, 0
      %p164 = por %p162, %p163
      %p165 = scmp.ne.s32.totalorder %s157, %s159
      %p166 = scmp.eq.s32.totalorder %s23, 1
      %p167 = por %p165, %p166
      %p168 = scmp.ne.s32.totalorder %s159, %s160
      %p169 = scmp.eq.s32.totalorder %s23, 0
      %p170 = por %p168, %p169
      %p171 = scmp.ne.s32.totalorder %s159, %s160
      %p172 = scmp.eq.s32.totalorder %s24, 1
      %p173 = por %p171, %p172
      %p175 = scmp.ne.s32.totalorder %s160, %s174
      %p176 = scmp.eq.s32.totalorder %s24, 0
      %p177 = por %p175, %p176
      %s178 = ssub.s32 %s18, %s25
      %p179 = scmp.eq.s32.totalorder %s178, 0
      %s181 = sadd.s32 %s180, 1
      %s182 = scalar_select %p179, %s180, %s181
      %p185 = pneg %p179
      %p186 = scmp.eq.s32.totalorder %s18, 1
      %p187 = por %p185, %p186
      %p188 = scmp.ne.s32.totalorder %s180, %s183
      %p189 = scmp.eq.s32.totalorder %s18, 0
      %p190 = por %p188, %p189
      %p191 = scmp.ne.s32.totalorder %s180, %s183
      %p192 = scmp.eq.s32.totalorder %s23, 1
      %p193 = por %p191, %p192
      %p194 = scmp.ne.s32.totalorder %s183, %s184
      %p195 = scmp.eq.s32.totalorder %s23, 0
      %p196 = por %p194, %p195
      %p197 = scmp.ne.s32.totalorder %s183, %s184
      %p198 = scmp.eq.s32.totalorder %s24, 1
      %p199 = por %p197, %p198
      %p201 = scmp.ne.s32.totalorder %s184, %s200
      %p202 = scmp.eq.s32.totalorder %s24, 0
      %p203 = por %p201, %p202
      %p204 = scmp.le.s32.totalorder 1, %s18
      %p205 = scmp.lt.s32.totalorder %s18, 3
      %p206 = pnand %p204, %p205
      %p207 = pneg %p206
      // Predicated region
      $region9: #{tpu_custom_call.1} parent=5 // pred_check
        _
      $region10: #{tpu_custom_call.1} parent=5 // pred_check_branch
        %209 = sbr.rel (%p206) target = $region12
      $region11: #{tpu_custom_call.1} parent=5 // pred_region
        %s210 = ssub.s32 %s18, 1
        // Predicated region
        $region13: #{tpu_custom_call.1} parent=11 // pred_check
          %p211 = pneg %p65
        $region14: #{tpu_custom_call.1} parent=11 // pred_check_branch
          %213 = sbr.rel (%p211) target = $region16
        $region15: #{tpu_custom_call.1} parent=11 // pred_region
          _
        $region16: #{tpu_custom_call.1} parent=11 // pred_fallthru
          _
        // Predicated region
        $region17: #{tpu_custom_call.1} parent=11 // pred_check
          %p214 = pneg %p86
        $region18: #{tpu_custom_call.1} parent=11 // pred_check_branch
          %216 = sbr.rel (%p214) target = $region20
        $region19: #{tpu_custom_call.1} parent=11 // pred_region
          _
        $region20: #{tpu_custom_call.1} parent=11 // pred_fallthru
          _
        // Predicated region
        $region21: #{tpu_custom_call.1} parent=11 // pred_check
          %p217 = pneg %p107
        $region22: #{tpu_custom_call.1} parent=11 // pred_check_branch
          %219 = sbr.rel (%p217) target = $region24
        $region23: #{tpu_custom_call.1} parent=11 // pred_region
          %s221 = ssub.s32 4096, 4096
          %222 = vsyncadd [#allocation3], %s221
          %s223 = sshll.u32 [#allocation2], 4
          %s224 = int_to_ptr.vmem [resolvable:$true] %s223
          %229 = dma.hbm_to_vmem [thread:$0]  %s3, 4096, %s224, [#allocation3], 256, 256, 16
        $region24: #{tpu_custom_call.1} parent=11 // pred_fallthru
          _
        // Predicated region
        $region25: #{tpu_custom_call.1} parent=11 // pred_check
          %p230 = pneg %p128
        $region26: #{tpu_custom_call.1} parent=11 // pred_check_branch
          %232 = sbr.rel (%p230) target = $region28
        $region27: #{tpu_custom_call.1} parent=11 // pred_region
          _
        $region28: #{tpu_custom_call.1} parent=11 // pred_fallthru
          _
        // Predicated region
        $region29: #{tpu_custom_call.1} parent=11 // pred_check
          %p233 = pneg %p149
        $region30: #{tpu_custom_call.1} parent=11 // pred_check_branch
          %235 = sbr.rel (%p233) target = $region32
        $region31: #{tpu_custom_call.1} parent=11 // pred_region
          %s237 = ssub.s32 8192, 8192
          %238 = vsyncadd [#allocation6], %s237
          %s239 = sshll.u32 [#allocation5], 4
          %s240 = int_to_ptr.vmem [resolvable:$true] %s239
          %245 = dma.hbm_to_vmem [thread:$0]  %s5, 8192, %s240, [#allocation6], 256, 256, 16
        $region32: #{tpu_custom_call.1} parent=11 // pred_fallthru
          _
        // Predicated region
        $region33: #{tpu_custom_call.1} parent=11 // pred_check
          %p246 = pneg %p170
        $region34: #{tpu_custom_call.1} parent=11 // pred_check_branch
          %248 = sbr.rel (%p246) target = $region36
        $region35: #{tpu_custom_call.1} parent=11 // pred_region
          _
        $region36: #{tpu_custom_call.1} parent=11 // pred_fallthru
          _
      $region12: #{tpu_custom_call.1} parent=5 // pred_fallthru
        _
      %p249 = scmp.lt.s32.totalorder %s18, 2
      // Predicated region
      $region37: #{tpu_custom_call.1} parent=5 // pred_check
        %p250 = pneg %p249
      $region38: #{tpu_custom_call.1} parent=5 // pred_check_branch
        %252 = sbr.rel (%p250) target = $region40
      $region39: #{tpu_custom_call.1} parent=5 // pred_region
        // Predicated region
        $region41: #{tpu_custom_call.1} parent=39 // pred_check
          %p253 = pneg %p38
        $region42: #{tpu_custom_call.1} parent=39 // pred_check_branch
          %255 = sbr.rel (%p253) target = $region44
        $region43: #{tpu_custom_call.1} parent=39 // pred_region
          %s256 = smul.u32 2, %s18
          %p257 = scmp.lt.s32.totalorder %s256, 3
          %s258 = scalar_select %p257, %s256, 3
          %s259 = smul.addr %s258, 8
          %s260 = scalar_lea.vmem %s0, %s259
          %s261 = smul.u32 2, %s18
        $region44: #{tpu_custom_call.1} parent=39 // pred_fallthru
          _
      $region40: #{tpu_custom_call.1} parent=5 // pred_fallthru
        _
      %p262 = scmp.le.s32.totalorder 1, %s18
      %p263 = scmp.lt.s32.totalorder %s18, 3
      %p264 = pnand %p262, %p263
      %p265 = pneg %p264
      // Predicated region
      $region45: #{tpu_custom_call.1} parent=5 // pred_check
        _
      $region46: #{tpu_custom_call.1} parent=5 // pred_check_branch
        %267 = sbr.rel (%p264) target = $region48
      $region47: #{tpu_custom_call.1} parent=5 // pred_region
        %s268 = ssub.s32 %s18, 1
        // Predicated region
        $region49: #{tpu_custom_call.1} parent=47 // pred_check
          %p269 = pneg %p107
        $region50: #{tpu_custom_call.1} parent=47 // pred_check_branch
          %271 = sbr.rel (%p269) target = $region52
        $region51: #{tpu_custom_call.1} parent=47 // pred_region
          %272 = dma.done [#allocation3], 4096
        $region52: #{tpu_custom_call.1} parent=47 // pred_fallthru
          _
        // Predicated region
        $region53: #{tpu_custom_call.1} parent=47 // pred_check
          %p273 = pneg %p149
        $region54: #{tpu_custom_call.1} parent=47 // pred_check_branch
          %275 = sbr.rel (%p273) target = $region56
        $region55: #{tpu_custom_call.1} parent=47 // pred_region
          %276 = dma.done [#allocation6], 8192
        $region56: #{tpu_custom_call.1} parent=47 // pred_fallthru
          _
        %s277 = smul.u32 2, %s23
        %p278 = scmp.lt.s32.totalorder %s277, 3
        %s279 = scalar_select %p278, %s277, 3
        %s280 = smul.addr %s279, 8
        %s281 = scalar_lea.vmem %s0, %s280
        %p282 = pneg %p44
        %p283 = pneg %p41
        %p284 = pneg %p65
        %p285 = pneg %p62
        %p286 = pneg %p86
        %p287 = pneg %p83
        %p288 = pneg %p107
        %p289 = pneg %p104
        %p290 = pneg %p128
        %p291 = pneg %p125
        %p292 = pneg %p149
        %p293 = pneg %p146
        %p294 = pneg %p170
        %p295 = pneg %p167
        %p296 = pneg %p196
        %p297 = pneg %p193
        %s298 = sand.u32 %s183, 1
        %s299 = scalar_lea.sflag [#allocation4], %s298
        %s300 = sand.u32 %s183, 1
        %s301 = smul.addr %s300, 32
        %s302 = scalar_lea.vmem [#allocation7], %s301
        %s303 = smul.u32 2, %s23
        %p304 = scmp.lt.s32.totalorder %s303, 3
        %s305 = scalar_select %p304, %s303, 3
        %s306 = smul.addr %s305, 8
        %s307 = scalar_lea.vmem %s0, %s306
        %s308 = smul.u32 2, %s23
        %s309 = smul.u32 2, %s23
        %v310 = vld [vmem:[%s307] sm:$0xff]
        %v311 = vld [vmem:[%s307 + $0x8] sm:$0xff]
        %v312 = vld [vmem:[%s1] sm:$0xff]
        %v313 = vld [vmem:[%s1 + $0x8] sm:$0xff]
        %v314 = vld [vmem:[%s2] sm:$0x1]
        %v316 = vlaneseq
        %v317 = vshrl.u32 %v316, 7
        %v318 = vsub.s32 0, %v317
        %v319 = vrot.slane %v314, %v318
        %vm321 = vcmask 130048
        %v323 = vsel %vm321, %v310, 0
        %v326 = vsel %vm321, %v311, 0
        %328 = vmatprep.subr.mxu0 0.0
        %329 = vmatpush1.msra.mxu0 0.0
        %330 = vmatprep.subr.mxu0 0.0
        %331 = vmatpush1.msra.mxu0 0.0
        %332 = vmatprep.subr.mxu0 0.0
        %333 = vmatpush1.msra.mxu0 0.0
        %334 = vmatprep.subr.mxu0 0.0
        %335 = vmatpush1.msra.mxu0 0.0
        %336 = vmatprep.subr.mxu0 0.0
        %337 = vmatpush1.msra.mxu0 0.0
        %338 = vmatprep.subr.mxu0 0.0
        %339 = vmatpush1.msra.mxu0 0.0
        %340 = vmatprep.subr.mxu0 0.0
        %341 = vmatpush1.msra.mxu0 0.0
        %342 = vmatprep.subr.mxu0 0.0
        %343 = vmatpush1.msra.mxu0 0.0
        %344 = vmatprep.subr.mxu0 0.0
        %345 = vmatpush1.msra.mxu0 0.0
        %346 = vmatprep.subr.mxu0 0.0
        %347 = vmatpush1.msra.mxu0 0.0
        %348 = vmatprep.subr.mxu0 0.0
        %349 = vmatpush1.msra.mxu0 0.0
        %350 = vmatprep.subr.mxu0 0.0
        %351 = vmatpush1.msra.mxu0 0.0
        %352 = vmatprep.subr.mxu0 0.0
        %353 = vmatpush1.msra.mxu0 0.0
        %354 = vmatprep.subr.mxu0 0.0
        %355 = vmatpush1.msra.mxu0 0.0
        %356 = vmatprep.subr.mxu0 0.0
        %357 = vmatpush1.msra.mxu0 %v313
        %358 = vmatprep.subr.mxu0 0.0
        %359 = vmatpush1.msra.mxu0 %v312
        %360 = vmatprep.subr.mxu0 0.0
        %361 = vmatpush2.msra.mxu0 0.0
        %362 = vmatprep.subr.mxu0 0.0
        %363 = vmatpush2.msra.mxu0 0.0
        %364 = vmatprep.subr.mxu0 0.0
        %365 = vmatpush2.msra.mxu0 0.0
        %366 = vmatprep.subr.mxu0 0.0
        %367 = vmatpush2.msra.mxu0 0.0
        %368 = vmatprep.subr.mxu0 0.0
        %369 = vmatpush2.msra.mxu0 0.0
        %370 = vmatprep.subr.mxu0 0.0
        %371 = vmatpush2.msra.mxu0 0.0
        %372 = vmatprep.subr.mxu0 0.0
        %373 = vmatpush2.msra.mxu0 0.0
        %374 = vmatprep.subr.mxu0 0.0
        %375 = vmatpush2.msra.mxu0 0.0
        %376 = vmatprep.subr.mxu0 0.0
        %377 = vmatpush2.msra.mxu0 0.0
        %378 = vmatprep.subr.mxu0 0.0
        %379 = vmatpush2.msra.mxu0 0.0
        %380 = vmatprep.subr.mxu0 0.0
        %381 = vmatpush2.msra.mxu0 0.0
        %382 = vmatprep.subr.mxu0 0.0
        %383 = vmatpush2.msra.mxu0 0.0
        %384 = vmatprep.subr.mxu0 0.0
        %385 = vmatpush2.msra.mxu0 0.0
        %386 = vmatprep.subr.mxu0 0.0
        %387 = vmatpush2.msra.mxu0 0.0
        %388 = vmatprep.subr.mxu0 0.0
        %389 = vmatpush2.msra.mxu0 0.0
        %390 = vmatprep.subr.mxu0 0.0
        %391 = vmatpush2.msra.mxu0 0.0
        %392 = vmatprep.mubr.f32.mxu0 0.0
        %393 = vmatmul.mubr.f32.gmra.mxu0 %v323
        %v394 = vpop.f32.mrf.mxu0
        %v395 = vadd.f32 %v319, %v394
        %v396 = vpop.f32.mrf.mxu0
        %397 = vmatprep.mubr.f32.mxu0 0.0
        %398 = vmatmul.mubr.f32.gmra.mxu0 %v326
        %v399 = vpop.f32.mrf.mxu0
        %v400 = vadd.f32 %v319, %v399
        %v401 = vpop.f32.mrf.mxu0
        %402 = vdwg.mxu0
        %v403 = vmax.f32 %v395, 0.0
        %v404 = vmax.f32 %v400, 0.0
        %v405 = vld [vmem:[#allocation2] sm:$0xff]
        %v406 = vld [vmem:[#allocation2 + $0x8] sm:$0xff]
        %v407 = vld [vmem:[#allocation2 + $0x10] sm:$0xff]
        %v408 = vld [vmem:[#allocation2 + $0x18] sm:$0xff]
        %v409 = vld [vmem:[#allocation2 + $0x20] sm:$0xff]
        %v410 = vld [vmem:[#allocation2 + $0x28] sm:$0xff]
        %v411 = vld [vmem:[#allocation2 + $0x30] sm:$0xff]
        %v412 = vld [vmem:[#allocation2 + $0x38] sm:$0xff]
        %v413 = vld [vmem:[#allocation2 + $0x40] sm:$0xff]
        %v414 = vld [vmem:[#allocation2 + $0x48] sm:$0xff]
        %v415 = vld [vmem:[#allocation2 + $0x50] sm:$0xff]
        %v416 = vld [vmem:[#allocation2 + $0x58] sm:$0xff]
        %v417 = vld [vmem:[#allocation2 + $0x60] sm:$0xff]
        %v418 = vld [vmem:[#allocation2 + $0x68] sm:$0xff]
        %v419 = vld [vmem:[#allocation2 + $0x70] sm:$0xff]
        %v420 = vld [vmem:[#allocation2 + $0x78] sm:$0xff]
        %v421 = vld [vmem:[#allocation2 + $0x80] sm:$0xff]
        %v422 = vld [vmem:[#allocation2 + $0x88] sm:$0xff]
        %v423 = vld [vmem:[#allocation2 + $0x90] sm:$0xff]
        %v424 = vld [vmem:[#allocation2 + $0x98] sm:$0xff]
        %v425 = vld [vmem:[#allocation2 + $0xa0] sm:$0xff]
        %v426 = vld [vmem:[#allocation2 + $0xa8] sm:$0xff]
        %v427 = vld [vmem:[#allocation2 + $0xb0] sm:$0xff]
        %v428 = vld [vmem:[#allocation2 + $0xb8] sm:$0xff]
        %v429 = vld [vmem:[#allocation2 + $0xc0] sm:$0xff]
        %v430 = vld [vmem:[#allocation2 + $0xc8] sm:$0xff]
        %v431 = vld [vmem:[#allocation2 + $0xd0] sm:$0xff]
        %v432 = vld [vmem:[#allocation2 + $0xd8] sm:$0xff]
        %v433 = vld [vmem:[#allocation2 + $0xe0] sm:$0xff]
        %v434 = vld [vmem:[#allocation2 + $0xe8] sm:$0xff]
        %v435 = vld [vmem:[#allocation2 + $0xf0] sm:$0xff]
        %v436 = vld [vmem:[#allocation2 + $0xf8] sm:$0xff]
        %v437 = vld [vmem:[%s4] sm:$0x3]
        %v439 = vlaneseq
        %v440 = vshrl.u32 %v439, 7
        %v441 = vsub.s32 0, %v440
        %v442 = vrot.slane %v437, %v441
        %v443 = vlaneseq
        %v444 = vshrl.u32 %v443, 7
        %v445 = vsub.s32 1, %v444
        %v446 = vrot.slane %v437, %v445
        %449 = vmatprep.subr.mxu0 %v436
        %450 = vmatpush1.msra.mxu0 %v435
        %451 = vmatprep.subr.mxu0 %v434
        %452 = vmatpush1.msra.mxu0 %v433
        %453 = vmatprep.subr.mxu0 %v432
        %454 = vmatpush1.msra.mxu0 %v431
        %455 = vmatprep.subr.mxu0 %v430
        %456 = vmatpush1.msra.mxu0 %v429
        %457 = vmatprep.subr.mxu0 %v428
        %458 = vmatpush1.msra.mxu0 %v427
        %459 = vmatprep.subr.mxu0 %v426
        %460 = vmatpush1.msra.mxu0 %v425
        %461 = vmatprep.subr.mxu0 %v424
        %462 = vmatpush1.msra.mxu0 %v423
        %463 = vmatprep.subr.mxu0 %v422
        %464 = vmatpush1.msra.mxu0 %v421
        %465 = vmatprep.subr.mxu0 %v420
        %466 = vmatpush1.msra.mxu0 %v419
        %467 = vmatprep.subr.mxu0 %v418
        %468 = vmatpush1.msra.mxu0 %v417
        %469 = vmatprep.subr.mxu0 %v416
        %470 = vmatpush1.msra.mxu0 %v415
        %471 = vmatprep.subr.mxu0 %v414
        %472 = vmatpush1.msra.mxu0 %v413
        %473 = vmatprep.subr.mxu0 %v412
        %474 = vmatpush1.msra.mxu0 %v411
        %475 = vmatprep.subr.mxu0 %v410
        %476 = vmatpush1.msra.mxu0 %v409
        %477 = vmatprep.subr.mxu0 %v408
        %478 = vmatpush1.msra.mxu0 %v407
        %479 = vmatprep.subr.mxu0 %v406
        %480 = vmatpush1.msra.mxu0 %v405
        %481 = vmatprep.subr.mxu0 0.0
        %482 = vmatpush2.msra.mxu0 0.0
        %483 = vmatprep.subr.mxu0 0.0
        %484 = vmatpush2.msra.mxu0 0.0
        %485 = vmatprep.subr.mxu0 0.0
        %486 = vmatpush2.msra.mxu0 0.0
        %487 = vmatprep.subr.mxu0 0.0
        %488 = vmatpush2.msra.mxu0 0.0
        %489 = vmatprep.subr.mxu0 0.0
        %490 = vmatpush2.msra.mxu0 0.0
        %491 = vmatprep.subr.mxu0 0.0
        %492 = vmatpush2.msra.mxu0 0.0
        %493 = vmatprep.subr.mxu0 0.0
        %494 = vmatpush2.msra.mxu0 0.0
        %495 = vmatprep.subr.mxu0 0.0
        %496 = vmatpush2.msra.mxu0 0.0
        %497 = vmatprep.subr.mxu0 0.0
        %498 = vmatpush2.msra.mxu0 0.0
        %499 = vmatprep.subr.mxu0 0.0
        %500 = vmatpush2.msra.mxu0 0.0
        %501 = vmatprep.subr.mxu0 0.0
        %502 = vmatpush2.msra.mxu0 0.0
        %503 = vmatprep.subr.mxu0 0.0
        %504 = vmatpush2.msra.mxu0 0.0
        %505 = vmatprep.subr.mxu0 0.0
        %506 = vmatpush2.msra.mxu0 0.0
        %507 = vmatprep.subr.mxu0 0.0
        %508 = vmatpush2.msra.mxu0 0.0
        %509 = vmatprep.subr.mxu0 0.0
        %510 = vmatpush2.msra.mxu0 0.0
        %511 = vmatprep.subr.mxu0 0.0
        %512 = vmatpush2.msra.mxu0 0.0
        %513 = vmatprep.mubr.f32.mxu0 0.0
        %514 = vmatmul.mubr.f32.gmra.mxu0 %v403
        %v515 = vpop.f32.mrf.mxu0
        %v516 = vadd.f32 %v442, %v515
        %v517 = vpop.f32.mrf.mxu0
        %v518 = vadd.f32 %v446, %v517
        %519 = vmatprep.mubr.f32.mxu0 0.0
        %520 = vmatmul.mubr.f32.gmra.mxu0 %v404
        %v521 = vpop.f32.mrf.mxu0
        %v522 = vadd.f32 %v442, %v521
        %v523 = vpop.f32.mrf.mxu0
        %v524 = vadd.f32 %v446, %v523
        %525 = vdwg.mxu0
        %v526 = vmax.f32 %v516, 0.0
        %v527 = vmax.f32 %v518, 0.0
        %v528 = vmax.f32 %v522, 0.0
        %v529 = vmax.f32 %v524, 0.0
        %v530 = vld [vmem:[#allocation5] sm:$0xff]
        %v531 = vld [vmem:[#allocation5 + $0x8] sm:$0xff]
        %v532 = vld [vmem:[#allocation5 + $0x10] sm:$0xff]
        %v533 = vld [vmem:[#allocation5 + $0x18] sm:$0xff]
        %v534 = vld [vmem:[#allocation5 + $0x20] sm:$0xff]
        %v535 = vld [vmem:[#allocation5 + $0x28] sm:$0xff]
        %v536 = vld [vmem:[#allocation5 + $0x30] sm:$0xff]
        %v537 = vld [vmem:[#allocation5 + $0x38] sm:$0xff]
        %v538 = vld [vmem:[#allocation5 + $0x40] sm:$0xff]
        %v539 = vld [vmem:[#allocation5 + $0x48] sm:$0xff]
        %v540 = vld [vmem:[#allocation5 + $0x50] sm:$0xff]
        %v541 = vld [vmem:[#allocation5 + $0x58] sm:$0xff]
        %v542 = vld [vmem:[#allocation5 + $0x60] sm:$0xff]
        %v543 = vld [vmem:[#allocation5 + $0x68] sm:$0xff]
        %v544 = vld [vmem:[#allocation5 + $0x70] sm:$0xff]
        %v545 = vld [vmem:[#allocation5 + $0x78] sm:$0xff]
        %v546 = vld [vmem:[#allocation5 + $0x80] sm:$0xff]
        %v547 = vld [vmem:[#allocation5 + $0x88] sm:$0xff]
        %v548 = vld [vmem:[#allocation5 + $0x90] sm:$0xff]
        %v549 = vld [vmem:[#allocation5 + $0x98] sm:$0xff]
        %v550 = vld [vmem:[#allocation5 + $0xa0] sm:$0xff]
        %v551 = vld [vmem:[#allocation5 + $0xa8] sm:$0xff]
        %v552 = vld [vmem:[#allocation5 + $0xb0] sm:$0xff]
        %v553 = vld [vmem:[#allocation5 + $0xb8] sm:$0xff]
        %v554 = vld [vmem:[#allocation5 + $0xc0] sm:$0xff]
        %v555 = vld [vmem:[#allocation5 + $0xc8] sm:$0xff]
        %v556 = vld [vmem:[#allocation5 + $0xd0] sm:$0xff]
        %v557 = vld [vmem:[#allocation5 + $0xd8] sm:$0xff]
        %v558 = vld [vmem:[#allocation5 + $0xe0] sm:$0xff]
        %v559 = vld [vmem:[#allocation5 + $0xe8] sm:$0xff]
        %v560 = vld [vmem:[#allocation5 + $0xf0] sm:$0xff]
        %v561 = vld [vmem:[#allocation5 + $0xf8] sm:$0xff]
        %v562 = vld [vmem:[#allocation5 + $0x100] sm:$0xff]
        %v563 = vld [vmem:[#allocation5 + $0x108] sm:$0xff]
        %v564 = vld [vmem:[#allocation5 + $0x110] sm:$0xff]
        %v565 = vld [vmem:[#allocation5 + $0x118] sm:$0xff]
        %v566 = vld [vmem:[#allocation5 + $0x120] sm:$0xff]
        %v567 = vld [vmem:[#allocation5 + $0x128] sm:$0xff]
        %v568 = vld [vmem:[#allocation5 + $0x130] sm:$0xff]
        %v569 = vld [vmem:[#allocation5 + $0x138] sm:$0xff]
        %v570 = vld [vmem:[#allocation5 + $0x140] sm:$0xff]
        %v571 = vld [vmem:[#allocation5 + $0x148] sm:$0xff]
        %v572 = vld [vmem:[#allocation5 + $0x150] sm:$0xff]
        %v573 = vld [vmem:[#allocation5 + $0x158] sm:$0xff]
        %v574 = vld [vmem:[#allocation5 + $0x160] sm:$0xff]
        %v575 = vld [vmem:[#allocation5 + $0x168] sm:$0xff]
        %v576 = vld [vmem:[#allocation5 + $0x170] sm:$0xff]
        %v577 = vld [vmem:[#allocation5 + $0x178] sm:$0xff]
        %v578 = vld [vmem:[#allocation5 + $0x180] sm:$0xff]
        %v579 = vld [vmem:[#allocation5 + $0x188] sm:$0xff]
        %v580 = vld [vmem:[#allocation5 + $0x190] sm:$0xff]
        %v581 = vld [vmem:[#allocation5 + $0x198] sm:$0xff]
        %v582 = vld [vmem:[#allocation5 + $0x1a0] sm:$0xff]
        %v583 = vld [vmem:[#allocation5 + $0x1a8] sm:$0xff]
        %v584 = vld [vmem:[#allocation5 + $0x1b0] sm:$0xff]
        %v585 = vld [vmem:[#allocation5 + $0x1b8] sm:$0xff]
        %v586 = vld [vmem:[#allocation5 + $0x1c0] sm:$0xff]
        %v587 = vld [vmem:[#allocation5 + $0x1c8] sm:$0xff]
        %v588 = vld [vmem:[#allocation5 + $0x1d0] sm:$0xff]
        %v589 = vld [vmem:[#allocation5 + $0x1d8] sm:$0xff]
        %v590 = vld [vmem:[#allocation5 + $0x1e0] sm:$0xff]
        %v591 = vld [vmem:[#allocation5 + $0x1e8] sm:$0xff]
        %v592 = vld [vmem:[#allocation5 + $0x1f0] sm:$0xff]
        %v593 = vld [vmem:[#allocation5 + $0x1f8] sm:$0xff]
        %v594 = vld [vmem:[%s6] sm:$0x3]
        %v596 = vlaneseq
        %v597 = vshrl.u32 %v596, 7
        %v598 = vsub.s32 0, %v597
        %v599 = vrot.slane %v594, %v598
        %v600 = vlaneseq
        %v601 = vshrl.u32 %v600, 7
        %v602 = vsub.s32 1, %v601
        %v603 = vrot.slane %v594, %v602
        %606 = vmatprep.subr.mxu0 %v561
        %607 = vmatpush1.msra.mxu0 %v560
        %608 = vmatprep.subr.mxu0 %v559
        %609 = vmatpush1.msra.mxu0 %v558
        %610 = vmatprep.subr.mxu0 %v557
        %611 = vmatpush1.msra.mxu0 %v556
        %612 = vmatprep.subr.mxu0 %v555
        %613 = vmatpush1.msra.mxu0 %v554
        %614 = vmatprep.subr.mxu0 %v553
        %615 = vmatpush1.msra.mxu0 %v552
        %616 = vmatprep.subr.mxu0 %v551
        %617 = vmatpush1.msra.mxu0 %v550
        %618 = vmatprep.subr.mxu0 %v549
        %619 = vmatpush1.msra.mxu0 %v548
        %620 = vmatprep.subr.mxu0 %v547
        %621 = vmatpush1.msra.mxu0 %v546
        %622 = vmatprep.subr.mxu0 %v545
        %623 = vmatpush1.msra.mxu0 %v544
        %624 = vmatprep.subr.mxu0 %v543
        %625 = vmatpush1.msra.mxu0 %v542
        %626 = vmatprep.subr.mxu0 %v541
        %627 = vmatpush1.msra.mxu0 %v540
        %628 = vmatprep.subr.mxu0 %v539
        %629 = vmatpush1.msra.mxu0 %v538
        %630 = vmatprep.subr.mxu0 %v537
        %631 = vmatpush1.msra.mxu0 %v536
        %632 = vmatprep.subr.mxu0 %v535
        %633 = vmatpush1.msra.mxu0 %v534
        %634 = vmatprep.subr.mxu0 %v533
        %635 = vmatpush1.msra.mxu0 %v532
        %636 = vmatprep.subr.mxu0 %v531
        %637 = vmatpush1.msra.mxu0 %v530
        %638 = vmatprep.subr.mxu0 %v593
        %639 = vmatpush2.msra.mxu0 %v592
        %640 = vmatprep.subr.mxu0 %v591
        %641 = vmatpush2.msra.mxu0 %v590
        %642 = vmatprep.subr.mxu0 %v589
        %643 = vmatpush2.msra.mxu0 %v588
        %644 = vmatprep.subr.mxu0 %v587
        %645 = vmatpush2.msra.mxu0 %v586
        %646 = vmatprep.subr.mxu0 %v585
        %647 = vmatpush2.msra.mxu0 %v584
        %648 = vmatprep.subr.mxu0 %v583
        %649 = vmatpush2.msra.mxu0 %v582
        %650 = vmatprep.subr.mxu0 %v581
        %651 = vmatpush2.msra.mxu0 %v580
        %652 = vmatprep.subr.mxu0 %v579
        %653 = vmatpush2.msra.mxu0 %v578
        %654 = vmatprep.subr.mxu0 %v577
        %655 = vmatpush2.msra.mxu0 %v576
        %656 = vmatprep.subr.mxu0 %v575
        %657 = vmatpush2.msra.mxu0 %v574
        %658 = vmatprep.subr.mxu0 %v573
        %659 = vmatpush2.msra.mxu0 %v572
        %660 = vmatprep.subr.mxu0 %v571
        %661 = vmatpush2.msra.mxu0 %v570
        %662 = vmatprep.subr.mxu0 %v569
        %663 = vmatpush2.msra.mxu0 %v568
        %664 = vmatprep.subr.mxu0 %v567
        %665 = vmatpush2.msra.mxu0 %v566
        %666 = vmatprep.subr.mxu0 %v565
        %667 = vmatpush2.msra.mxu0 %v564
        %668 = vmatprep.subr.mxu0 %v563
        %669 = vmatpush2.msra.mxu0 %v562
        %670 = vmatprep.mubr.f32.mxu0 %v527
        %671 = vmatmul.mubr.f32.gmra.mxu0 %v526
        %v672 = vpop.f32.mrf.mxu0
        %v673 = vadd.f32 %v599, %v672
        %v674 = vpop.f32.mrf.mxu0
        %v675 = vadd.f32 %v603, %v674
        %676 = vmatprep.mubr.f32.mxu0 %v529
        %677 = vmatmul.mubr.f32.gmra.mxu0 %v528
        %v678 = vpop.f32.mrf.mxu0
        %v679 = vadd.f32 %v599, %v678
        %v680 = vpop.f32.mrf.mxu0
        %v681 = vadd.f32 %v603, %v680
        %682 = vdwg.mxu0
        %v683 = vmax.f32 %v675, -11.512925
        %v684 = vmax.f32 %v681, -11.512925
        %v685 = vmin.f32 %v683, 11.512925
        %v686 = vmin.f32 %v684, 11.512925
        %v687 = vmul.f32 %v685, 1.442695
        %v688 = vpow.pop %v687
        %v689 = vmul.f32 %v686, 1.442695
        %v690 = vpow.pop %v689
        %691 = vst [vmem:[%s302] sm:$0xff] %v673
        %692 = vst [vmem:[%s302 + $0x10] sm:$0xff] %v679
        %693 = vst [vmem:[%s302 + $0x8] sm:$0xff] %v688
        %694 = vst [vmem:[%s302 + $0x18] sm:$0xff] %v690
        %s695 = sand.u32 %s183, 1
        %s696 = scalar_lea.sflag [#allocation4], %s695
        %s697 = sand.u32 %s183, 1
        %s698 = smul.addr %s697, 32
        %s699 = scalar_lea.vmem [#allocation7], %s698
        // Predicated region
        $region57: #{tpu_custom_call.1} parent=47 // pred_check
          %p700 = pneg %p193
        $region58: #{tpu_custom_call.1} parent=47 // pred_check_branch
          %702 = sbr.rel (%p700) target = $region60
        $region59: #{tpu_custom_call.1} parent=47 // pred_region
          %s703 = smul.u32 2, %s23
          %s705 = ssub.s32 512, 512
          %706 = vsyncadd %s696, %s705
          %s707 = smul.addr %s703, 2
          %s708 = smul.addr %s707, 128
          %s709 = scalar_lea.hbm %s7, %s708
          %s710 = sshll.u32 %s699, 4
          %s711 = int_to_ptr.vmem [resolvable:$true] %s710
          %716 = dma.vmem_to_hbm [thread:$0]  %s711, 512, %s709, %s696, 256, 256, 16
        $region60: #{tpu_custom_call.1} parent=47 // pred_fallthru
          _
      $region48: #{tpu_custom_call.1} parent=5 // pred_fallthru
        _
      %p717 = scmp.le.s32.totalorder 2, %s18
      // Predicated region
      $region61: #{tpu_custom_call.1} parent=5 // pred_check
        %p718 = pneg %p717
      $region62: #{tpu_custom_call.1} parent=5 // pred_check_branch
        %720 = sbr.rel (%p718) target = $region64
      $region63: #{tpu_custom_call.1} parent=5 // pred_region
        %s721 = ssub.s32 %s18, 2
        // Predicated region
        $region65: #{tpu_custom_call.1} parent=63 // pred_check
          %p722 = pneg %p199
        $region66: #{tpu_custom_call.1} parent=63 // pred_check_branch
          %724 = sbr.rel (%p722) target = $region68
        $region67: #{tpu_custom_call.1} parent=63 // pred_region
          %s725 = sand.u32 %s184, 1
          %s726 = scalar_lea.sflag [#allocation4], %s725
          %s727 = sand.u32 %s184, 1
          %s728 = smul.addr %s727, 32
          %s729 = scalar_lea.vmem [#allocation7], %s728
          %730 = dma.done %s726, 512
        $region68: #{tpu_custom_call.1} parent=63 // pred_fallthru
          _
      $region64: #{tpu_custom_call.1} parent=5 // pred_fallthru
        _
    $region6: #{tpu_custom_call.1} parent=1 // loop_footer
      %s22 = sadd.s32 1, %s18
    $region7: #{tpu_custom_call.1} parent=1 // loop_footer_branch
      %17 = sbr.rel target = $region3
    $region8: #{tpu_custom_call.1} parent=1 // loop_exit
      _
    %731 = vsyncpa [#allocation3], 1
    %s732 = scalar_lea.sflag [#allocation3], 1
    %733 = vsyncpa %s732, 1
    %734 = vsyncpa [#allocation6], 1
    %735 = vsyncpa [#allocation4], 1
    %s736 = scalar_lea.sflag [#allocation4], 1
    %737 = vsyncpa %s736, 1

</llo_original>
